<compile_context>
chip_gen: v7x
topology: tpu7x:2x2x1
jax: 0.10.0
libtpu: 0.0.40
codegen_flags: <defaults>
</compile_context>

<pallas_src>
import math

import jax
import jax.numpy as jnp
from jax.experimental import pallas as pl
from jax.experimental.pallas import tpu as pltpu


def _round_up(a, b):
    return (a + b - 1) // b * b


def _cdiv(a, b):
    return (a + b - 1) // b


def _gelu_tanh(x):
    # Exact match to the PyTorch module's gelu_tanh.
    c = math.sqrt(2.0 / math.pi)
    return 0.5 * x * (1.0 + jnp.tanh(c * (x + 0.044715 * (x ** 3))))


def _vmem_capacity_bytes():
    try:
        info = pltpu.get_tpu_info()
        cap = getattr(info, "vmem_capacity_bytes", None)
        if cap:
            return int(cap)
    except Exception:
        pass
    return 64 * 1024 * 1024  # conservative: assume v7x-sized VMEM


def _clamp_vmem(need_bytes, cap):
    return int(min(max(need_bytes, 32 * 1024 * 1024), int(0.9 * cap)))


# ----------------------------------------------------------------------------
# Resident-weight plan: grid = (row tiles,), weights live in VMEM for the
# whole call; the I reduction is a statically-unrolled in-kernel loop.
# ----------------------------------------------------------------------------
def _make_resident_kernel(i_chunks):
    def kernel(x_ref, w1_ref, b1_ref, w2_ref, b2_ref, o_ref, acc_ref):
        x = x_ref[...]  # load the row tile once, reuse for every I chunk
        for ci, (off, sz) in enumerate(i_chunks):
            h = jnp.dot(x, w1_ref[:, off:off + sz],
                        preferred_element_type=jnp.float32)
            h = _gelu_tanh(h + b1_ref[:, off:off + sz])
            p = jnp.dot(h.astype(w2_ref.dtype), w2_ref[off:off + sz, :],
                        preferred_element_type=jnp.float32)
            if ci == 0:
                acc_ref[...] = p          # no separate zero-init pass
            else:
                acc_ref[...] += p
        o_ref[...] = (acc_ref[...] + b2_ref[...]).astype(o_ref.dtype)

    return kernel


# ----------------------------------------------------------------------------
# Tiled fallback plan: grid = (row tiles, I tiles); weights streamed in
# ti-sized slices.  Only used when the weights do not fit VMEM.
# ----------------------------------------------------------------------------
def _tiled_kernel(x_ref, w1_ref, b1_ref, w2_ref, b2_ref, o_ref, acc_ref):
    i = pl.program_id(1)

    h = jnp.dot(x_ref[...], w1_ref[...],
                preferred_element_type=jnp.float32) + b1_ref[...]
    h = _gelu_tanh(h)
    p = jnp.dot(h.astype(w2_ref.dtype), w2_ref[...],
                preferred_element_type=jnp.float32)

    @pl.when(i == 0)
    def _first():
        acc_ref[...] = p

    @pl.when(i > 0)
    def _rest():
        acc_ref[...] += p

    @pl.when(i == pl.num_programs(1) - 1)
    def _finalize():
        o_ref[...] = (acc_ref[...] + b2_ref[...]).astype(o_ref.dtype)


def siglip_mlp(x, w1, b1, w2, b2, *, tm=512, ti=512,
               weights_resident=None, vmem_limit_bytes=None):
    """x: [B, S, H]; w1: [H, I]; b1: [I]; w2: [I, H]; b2: [H] -> [B, S, H].

    tm: row (token) tile (sweepable; collapses to M for small inputs).
    ti: intermediate-dim chunk / tile size (sweepable).
    weights_resident: force/forbid the VMEM-resident weight plan
      (default: auto based on chip VMEM capacity).
    """
    B, S, H = x.shape
    I = w1.shape[1]
    assert w1.shape == (H, I) and w2.shape == (I, H)
    assert b1.shape == (I,) and b2.shape == (H,)
    M = B * S
    out_dtype = x.dtype

    cap = _vmem_capacity_bytes()
    wbytes = (w1.size * w1.dtype.itemsize + w2.size * w2.dtype.itemsize
              + b1.size * b1.dtype.itemsize + b2.size * b2.dtype.itemsize)
    if weights_resident is None:
        # Budget 2x weight bytes (possible double-buffering of the resident
        # blocks) against 80% of VMEM: bf16 weights resident everywhere,
        # f32 so400m-size weights resident on 128 MiB chips, tiled on v7x.
        weights_resident = (2 * wbytes) <= int(0.8 * cap)

    # ---- row tiling -------------------------------------------------------
    sublane = 16 if x.dtype == jnp.bfloat16 else 8
    x2 = x.reshape(M, H)
    if M <= tm:
        tm_eff, m_pad = M, M                 # single full-dim row tile, no pad
    else:
        tm_eff = max(sublane, _round_up(min(tm, M), sublane))
        n_tiles = _cdiv(M, tm_eff)
        if n_tiles > 1 and n_tiles % 2 == 1:
            # Prefer an even row-tile count so both v7x TensorCores stay busy.
            tm_eff = max(sublane, _round_up(_cdiv(M, n_tiles + 1), sublane))
            n_tiles = _cdiv(M, tm_eff)
        m_pad = tm_eff * n_tiles
    if m_pad != M:
        # TODO(synk): ragged last row tile could use a masked store instead of
        # this HBM pad copy; cost is <= tm rows so it is minor.
        x2 = jnp.pad(x2, ((0, m_pad - M), (0, 0)))

    b2r = b2.reshape(1, H)
    x_bytes = x2.dtype.itemsize
    o_bytes = jnp.dtype(out_dtype).itemsize

    if weights_resident:
        # ---- resident plan ------------------------------------------------
        ti_eff = max(128, min(ti, I))
        chunks, off = [], 0
        while off < I:                       # static ragged chunks, no I pad
            sz = min(ti_eff, I - off)
            chunks.append((off, sz))
            off += sz

        if vmem_limit_bytes is None:
            tile_bytes = (2 * tm_eff * H * x_bytes      # double-buffered x
                          + 2 * tm_eff * H * o_bytes    # double-buffered out
                          + tm_eff * H * 4              # f32 accumulator
                          + 4 * tm_eff * ti_eff * 4)    # h / p temporaries
            vmem_limit_bytes = _clamp_vmem(2 * wbytes + tile_bytes + (4 << 20),
                                           cap)

        out = pl.pallas_call(
            _make_resident_kernel(tuple(chunks)),
            out_shape=jax.ShapeDtypeStruct((m_pad, H), out_dtype),
            grid_spec=pltpu.PrefetchScalarGridSpec(
                num_scalar_prefetch=0,
                grid=(m_pad // tm_eff,),
                in_specs=[
                    pl.BlockSpec((tm_eff, H), lambda m: (m, 0)),  # x row tile
                    pl.BlockSpec((H, I), lambda m: (0, 0)),       # w1 resident
                    pl.BlockSpec((1, I), lambda m: (0, 0)),       # b1 resident
                    pl.BlockSpec((I, H), lambda m: (0, 0)),       # w2 resident
                    pl.BlockSpec((1, H), lambda m: (0, 0)),       # b2 resident
                ],
                out_specs=pl.BlockSpec((tm_eff, H), lambda m: (m, 0)),
                scratch_shapes=[pltpu.VMEM((tm_eff, H), jnp.float32)],
            ),
            compiler_params=pltpu.CompilerParams(
                dimension_semantics=("parallel",),
                vmem_limit_bytes=vmem_limit_bytes,
            ),
        )(x2, w1, b1.reshape(1, I), w2, b2r)
    else:
        # ---- tiled fallback plan (weights too big for VMEM residency) -----
        ti_eff = max(128, min(_round_up(ti, 128), _round_up(I, 128)))
        i_pad = _round_up(I, ti_eff)
        w1p, b1p, w2p = w1, b1, w2
        if i_pad != I:
            # Zero-padding I is exact (gelu(0)=0, padded w2 rows are zero).
            # TODO(synk): in production pre-pad the weights once outside the
            # hot path instead of copying ~wbytes per call here.
            w1p = jnp.pad(w1, ((0, 0), (0, i_pad - I)))
            b1p = jnp.pad(b1, ((0, i_pad - I),))
            w2p = jnp.pad(w2, ((0, i_pad - I), (0, 0)))

        if vmem_limit_bytes is None:
            wt = w1.dtype.itemsize
            tile_bytes = (2 * (tm_eff * H * x_bytes + H * ti_eff * wt
                               + ti_eff * wt + ti_eff * H * wt
                               + tm_eff * H * o_bytes)
                          + tm_eff * H * 4
                          + 4 * tm_eff * ti_eff * 4)
            vmem_limit_bytes = _clamp_vmem(tile_bytes + (4 << 20), cap)

        out = pl.pallas_call(
            _tiled_kernel,
            out_shape=jax.ShapeDtypeStruct((m_pad, H), out_dtype),
            grid_spec=pltpu.PrefetchScalarGridSpec(
                num_scalar_prefetch=0,
                grid=(m_pad // tm_eff, i_pad // ti_eff),
                in_specs=[
                    pl.BlockSpec((tm_eff, H), lambda m, i: (m, 0)),   # x
                    pl.BlockSpec((H, ti_eff), lambda m, i: (0, i)),   # w1 slice
                    pl.BlockSpec((1, ti_eff), lambda m, i: (0, i)),   # b1 slice
                    pl.BlockSpec((ti_eff, H), lambda m, i: (i, 0)),   # w2 slice
                    pl.BlockSpec((1, H), lambda m, i: (0, 0)),        # b2
                ],
                out_specs=pl.BlockSpec((tm_eff, H), lambda m, i: (m, 0)),
                scratch_shapes=[pltpu.VMEM((tm_eff, H), jnp.float32)],
            ),
            compiler_params=pltpu.CompilerParams(
                dimension_semantics=("parallel", "arbitrary"),
                vmem_limit_bytes=vmem_limit_bytes,
            ),
        )(x2, w1p, b1p.reshape(1, i_pad), w2p, b2r)

    if m_pad != M:
        out = out[:M]
    return out.reshape(B, S, H)


def _ref_mlp(x, w1, b1, w2, b2):
    h = jnp.dot(x, w1) + b1
    h = _gelu_tanh(h)
    return jnp.dot(h, w2) + b2


if __name__ == "__main__":
    # Small shapes consistent with the module: hidden=32, intermediate=128,
    # tokens = batch(2) * seq(8) = 16.
    B, S, H, I = 2, 8, 32, 128
    key = jax.random.PRNGKey(0)
    kx, k1, k2, k3, k4 = jax.random.split(key, 5)

    x = jax.random.normal(kx, (B, S, H), dtype=jnp.float32)

    # Deterministic init mimicking nn.Linear (uniform +/- 1/sqrt(fan_in)).
    bound1 = 1.0 / math.sqrt(H)
    bound2 = 1.0 / math.sqrt(I)
    w1 = jax.random.uniform(k1, (H, I), jnp.float32, -bound1, bound1)  # fc1.weight.T
    b1 = jax.random.uniform(k2, (I,), jnp.float32, -bound1, bound1)    # fc1.bias
    w2 = jax.random.uniform(k3, (I, H), jnp.float32, -bound2, bound2)  # fc2.weight.T
    b2 = jax.random.uniform(k4, (H,), jnp.float32, -bound2, bound2)    # fc2.bias

    y_ref = _ref_mlp(x, w1, b1, w2, b2)

    # f32, resident-weight path (auto-selected): tight parity with reference.
    y = jax.block_until_ready(siglip_mlp(x, w1, b1, w2, b2))
    assert y.shape == (B, S, H)
    assert jnp.allclose(y, y_ref, atol=1e-5, rtol=1e-5), "f32 mismatch vs reference"

    # Exercise the tiled fallback path too (forced), same tolerance.
    y_t = jax.block_until_ready(
        siglip_mlp(x, w1, b1, w2, b2, weights_resident=False))
    assert jnp.allclose(y_t, y_ref, atol=1e-5, rtol=1e-5), "tiled-path mismatch"

    # bf16 operands (production path on v6e/v7x): f32 accumulation inside the
    # kernel; looser tolerance reflects the intentional bf16 cast of the GELU
    # output before fc2 (full-rate MXU), not a bug.
    to_bf16 = lambda a: a.astype(jnp.bfloat16)
    yb = jax.block_until_ready(
        siglip_mlp(to_bf16(x), to_bf16(w1), to_bf16(b1), to_bf16(w2), to_bf16(b2)))
    assert jnp.allclose(yb.astype(jnp.float32), y_ref, atol=5e-2, rtol=5e-2), \
        "bf16 mismatch vs reference"

    print("KERNEL_OK")
</pallas_src>

<mosaic_0001>
module attributes {stable_mosaic.version = 11 : i64} {
  func.func @kernel(%arg0: i32, %arg1: memref<16x32xf32, #tpu.memory_space<vmem>>, %arg2: memref<32x128xf32, #tpu.memory_space<vmem>>, %arg3: memref<1x128xf32, #tpu.memory_space<vmem>>, %arg4: memref<128x32xf32, #tpu.memory_space<vmem>>, %arg5: memref<1x32xf32, #tpu.memory_space<vmem>>, %arg6: memref<16x32xf32, #tpu.memory_space<vmem>>, %arg7: memref<16x32xf32, #tpu.memory_space<vmem>>) attributes {dimension_semantics = [#tpu.dimension_semantics<parallel>], iteration_bounds = array<i64: 1>, scalar_prefetch = 0 : i64, scratch_operands = 1 : i64, tpu.core_type = #tpu.core_type<tc>, window_params = [{transform_indices = @transform_0, window_bounds = array<i64: 16, 32>}, {pipeline_mode = #tpu.pipeline_mode<synchronous>, transform_indices = @transform_1, window_bounds = array<i64: 32, 128>}, {pipeline_mode = #tpu.pipeline_mode<synchronous>, transform_indices = @transform_2, window_bounds = array<i64: 1, 128>}, {pipeline_mode = #tpu.pipeline_mode<synchronous>, transform_indices = @transform_3, window_bounds = array<i64: 128, 32>}, {pipeline_mode = #tpu.pipeline_mode<synchronous>, transform_indices = @transform_4, window_bounds = array<i64: 1, 32>}, {transform_indices = @transform_5, window_bounds = array<i64: 16, 32>}]} {
    %c0 = arith.constant 0 : index
    %c0_0 = arith.constant 0 : index
    %0 = vector.load %arg1[%c0, %c0_0] : memref<16x32xf32, #tpu.memory_space<vmem>>, vector<16x32xf32>
    %c0_1 = arith.constant 0 : index
    %c0_2 = arith.constant 0 : index
    %1 = vector.load %arg2[%c0_1, %c0_2] : memref<32x128xf32, #tpu.memory_space<vmem>>, vector<32x128xf32>
    %cst = arith.constant dense<0.000000e+00> : vector<16x128xf32>
    %2 = tpu.matmul %0, %1, %cst {dimension_numbers = #tpu.dot_dimension_numbers<[1], [0], [0], [1], [0, 0, 1, 1], [], []>} : vector<16x32xf32>, vector<32x128xf32>, vector<16x128xf32> -> vector<16x128xf32>
    %c0_3 = arith.constant 0 : index
    %c0_4 = arith.constant 0 : index
    %3 = vector.load %arg3[%c0_3, %c0_4] : memref<1x128xf32, #tpu.memory_space<vmem>>, vector<1x128xf32>
    %4 = vector.broadcast %3 : vector<1x128xf32> to vector<16x128xf32>
    %5 = arith.addf %2, %4 : vector<16x128xf32>
    %cst_5 = arith.constant 5.000000e-01 : f32
    %6 = vector.broadcast %cst_5 : f32 to vector<16x128xf32>
    %7 = arith.mulf %6, %5 : vector<16x128xf32>
    %8 = arith.mulf %5, %5 : vector<16x128xf32>
    %9 = arith.mulf %5, %8 : vector<16x128xf32>
    %cst_6 = arith.constant 4.471500e-02 : f32
    %10 = vector.broadcast %cst_6 : f32 to vector<16x128xf32>
    %11 = arith.mulf %10, %9 : vector<16x128xf32>
    %12 = arith.addf %5, %11 : vector<16x128xf32>
    %cst_7 = arith.constant 0.797884583 : f32
    %13 = vector.broadcast %cst_7 : f32 to vector<16x128xf32>
    %14 = arith.mulf %13, %12 : vector<16x128xf32>
    %15 = math.tanh %14 : vector<16x128xf32>
    %cst_8 = arith.constant 1.000000e+00 : f32
    %16 = vector.broadcast %cst_8 : f32 to vector<16x128xf32>
    %17 = arith.addf %16, %15 : vector<16x128xf32>
    %18 = arith.mulf %7, %17 : vector<16x128xf32>
    %c0_9 = arith.constant 0 : index
    %c0_10 = arith.constant 0 : index
    %19 = vector.load %arg4[%c0_9, %c0_10] : memref<128x32xf32, #tpu.memory_space<vmem>>, vector<128x32xf32>
    %cst_11 = arith.constant dense<0.000000e+00> : vector<16x32xf32>
    %20 = tpu.matmul %18, %19, %cst_11 {dimension_numbers = #tpu.dot_dimension_numbers<[1], [0], [0], [1], [0, 0, 1, 1], [], []>} : vector<16x128xf32>, vector<128x32xf32>, vector<16x32xf32> -> vector<16x32xf32>
    %c0_12 = arith.constant 0 : index
    %c0_13 = arith.constant 0 : index
    %21 = vector.load %arg7[%c0_12, %c0_13] : memref<16x32xf32, #tpu.memory_space<vmem>>, vector<16x32xf32>
    tpu.vector_store %arg7[%c0_12, %c0_13], %20 {strides = array<i32>} : memref<16x32xf32, #tpu.memory_space<vmem>>, vector<16x32xf32>,
    %c0_14 = arith.constant 0 : index
    %c0_15 = arith.constant 0 : index
    %22 = vector.load %arg7[%c0_14, %c0_15] : memref<16x32xf32, #tpu.memory_space<vmem>>, vector<16x32xf32>
    %c0_16 = arith.constant 0 : index
    %c0_17 = arith.constant 0 : index
    %23 = vector.load %arg5[%c0_16, %c0_17] : memref<1x32xf32, #tpu.memory_space<vmem>>, vector<1x32xf32>
    %24 = vector.broadcast %23 : vector<1x32xf32> to vector<16x32xf32>
    %25 = arith.addf %22, %24 : vector<16x32xf32>
    %c0_18 = arith.constant 0 : index
    %c0_19 = arith.constant 0 : index
    %26 = vector.load %arg6[%c0_18, %c0_19] : memref<16x32xf32, #tpu.memory_space<vmem>>, vector<16x32xf32>
    tpu.vector_store %arg6[%c0_18, %c0_19], %25 {strides = array<i32>} : memref<16x32xf32, #tpu.memory_space<vmem>>, vector<16x32xf32>,
    return
  }
  func.func @transform_0(%arg0: i32) -> (i32, i32) {
    %c0_i32 = arith.constant 0 : i32
    %c0_i32_0 = arith.constant 0 : i32
    return %arg0, %c0_i32 : i32, i32
  }
  func.func @transform_1(%arg0: i32) -> (i32, i32) {
    %c0_i32 = arith.constant 0 : i32
    %c0_i32_0 = arith.constant 0 : i32
    %c0_i32_1 = arith.constant 0 : i32
    return %c0_i32, %c0_i32_0 : i32, i32
  }
  func.func @transform_2(%arg0: i32) -> (i32, i32) {
    %c0_i32 = arith.constant 0 : i32
    %c0_i32_0 = arith.constant 0 : i32
    %c0_i32_1 = arith.constant 0 : i32
    return %c0_i32, %c0_i32_0 : i32, i32
  }
  func.func @transform_3(%arg0: i32) -> (i32, i32) {
    %c0_i32 = arith.constant 0 : i32
    %c0_i32_0 = arith.constant 0 : i32
    %c0_i32_1 = arith.constant 0 : i32
    return %c0_i32, %c0_i32_0 : i32, i32
  }
  func.func @transform_4(%arg0: i32) -> (i32, i32) {
    %c0_i32 = arith.constant 0 : i32
    %c0_i32_0 = arith.constant 0 : i32
    %c0_i32_1 = arith.constant 0 : i32
    return %c0_i32, %c0_i32_0 : i32, i32
  }
  func.func @transform_5(%arg0: i32) -> (i32, i32) {
    %c0_i32 = arith.constant 0 : i32
    %c0_i32_0 = arith.constant 0 : i32
    return %arg0, %c0_i32 : i32, i32
  }
}

</mosaic_0001>

<llo_original>
// kernel: tpu_custom_call.1
$region0: #{tpu_custom_call.1}
  #allocation0 [shape = 'u32[]', space=smem, size = 0x4, offset = 0x4, fixed_abs, tag = 'smem constant byte address 0x4 - core index']
  #allocation1 [shape = 'u32[144,128]{1,0:T(1,128)}', space=vmem, size = 0x12000, scoped, tag = 'internal scratch']
  #allocation2 [shape = 'f32[16,32]{1,0:T(8,128)}', space=vmem, size = 0x2000, scoped, tag = 'scratch operand']
  %s0 = inlined_call_operand.vmem [shape: f32[16,32], index: 0, kind: input, shape index: {}]
  %s1 = inlined_call_operand.vmem [shape: f32[32,128], index: 1, kind: input, shape index: {}]
  %s2 = inlined_call_operand.vmem [shape: f32[1,128], index: 2, kind: input, shape index: {}]
  %s3 = inlined_call_operand.vmem [shape: f32[128,32], index: 3, kind: input, shape index: {}]
  %s4 = inlined_call_operand.vmem [shape: f32[1,32], index: 4, kind: input, shape index: {}]
  %s5 = inlined_call_operand.hbm [shape: f32[16,32], index: 5, kind: output, shape index: {}]
  %s6 = sld [smem:[#allocation0]]
  $region30: #{tpu_custom_call.1} parent=0
    _
  %s8 = ssub.s32 1, %s6
  %s9 = scalar_select 0, %s8, %s6
  $region1: #{tpu_custom_call.1} parent=0
    #allocation3 [shape = 'u8[8192]{0}', space=vmem, size = 0x2000, scoped, tag = 'output window, operand 0, single buffered']
    #allocation4 [shape = 's32[1]{0}', space=sflag, size = 0x4, scoped, tag = 'scoped memory for tpu_custom_call.1']
    %10 = vsyncpa [#allocation4], 0
    // Predicated region
    $region2: #{tpu_custom_call.1} parent=1 // pred_check
      _
    $region3: #{tpu_custom_call.1} parent=1 // pred_check_branch
      %12 = sbr.rel (0) target = $region5
    $region4: #{tpu_custom_call.1} parent=1 // pred_region
      _
    $region5: #{tpu_custom_call.1} parent=1 // pred_fallthru
      _
    // Predicated region
    $region6: #{tpu_custom_call.1} parent=1 // pred_check
      _
    $region7: #{tpu_custom_call.1} parent=1 // pred_check_branch
      %14 = sbr.rel (0) target = $region9
    $region8: #{tpu_custom_call.1} parent=1 // pred_region
      _
    $region9: #{tpu_custom_call.1} parent=1 // pred_fallthru
      _
    // Predicated region
    $region10: #{tpu_custom_call.1} parent=1 // pred_check
      _
    $region11: #{tpu_custom_call.1} parent=1 // pred_check_branch
      %16 = sbr.rel (0) target = $region13
    $region12: #{tpu_custom_call.1} parent=1 // pred_region
      _
    $region13: #{tpu_custom_call.1} parent=1 // pred_fallthru
      _
    // Predicated region
    $region14: #{tpu_custom_call.1} parent=1 // pred_check
      _
    $region15: #{tpu_custom_call.1} parent=1 // pred_check_branch
      %18 = sbr.rel (0) target = $region17
    $region16: #{tpu_custom_call.1} parent=1 // pred_region
      _
    $region17: #{tpu_custom_call.1} parent=1 // pred_fallthru
      _
    // Predicated region
    $region18: #{tpu_custom_call.1} parent=1 // pred_check
      _
    $region19: #{tpu_custom_call.1} parent=1 // pred_check_branch
      %20 = sbr.rel (0) target = $region21
    $region20: #{tpu_custom_call.1} parent=1 // pred_region
      _
    $region21: #{tpu_custom_call.1} parent=1 // pred_fallthru
      _
    %v21 = vld [vmem:[%s0] sm:$0xff]
    %v22 = vld [vmem:[%s0 + $0x8] sm:$0xff]
    %v23 = vld [vmem:[%s1] sm:$0xff]
    %v24 = vld [vmem:[%s1 + $0x8] sm:$0xff]
    %v25 = vld [vmem:[%s1 + $0x10] sm:$0xff]
    %v26 = vld [vmem:[%s1 + $0x18] sm:$0xff]
    %v27 = vld [vmem:[%s2] sm:$0x1]
    %v29 = vlaneseq
    %v30 = vshrl.u32 %v29, 7
    %v31 = vsub.s32 0, %v30
    %v32 = vrot.slane %v27, %v31
    %vm34 = vcmask 261120
    %v36 = vsel %vm34, %v21, 0
    %v39 = vsel %vm34, %v22, 0
    %41 = vmatprep.subr.mxu0 0.0
    %42 = vmatpush1.msra.mxu0 %v23
    %43 = vmatprep.subr.mxu0 0.0
    %44 = vmatpush1.msra.mxu0 %v24
    %45 = vmatprep.subr.mxu0 0.0
    %46 = vmatpush1.msra.mxu0 %v25
    %47 = vmatprep.subr.mxu0 0.0
    %48 = vmatpush1.msra.mxu0 %v26
    %49 = vmatprep.subr.mxu0 0.0
    %50 = vmatpush1.msra.mxu0 0.0
    %51 = vmatprep.subr.mxu0 0.0
    %52 = vmatpush1.msra.mxu0 0.0
    %53 = vmatprep.subr.mxu0 0.0
    %54 = vmatpush1.msra.mxu0 0.0
    %55 = vmatprep.subr.mxu0 0.0
    %56 = vmatpush1.msra.mxu0 0.0
    %57 = vmatprep.subr.mxu0 0.0
    %58 = vmatpush1.msra.mxu0 0.0
    %59 = vmatprep.subr.mxu0 0.0
    %60 = vmatpush1.msra.mxu0 0.0
    %61 = vmatprep.subr.mxu0 0.0
    %62 = vmatpush1.msra.mxu0 0.0
    %63 = vmatprep.subr.mxu0 0.0
    %64 = vmatpush1.msra.mxu0 0.0
    %65 = vmatprep.subr.mxu0 0.0
    %66 = vmatpush1.msra.mxu0 0.0
    %67 = vmatprep.subr.mxu0 0.0
    %68 = vmatpush1.msra.mxu0 0.0
    %69 = vmatprep.subr.mxu0 0.0
    %70 = vmatpush1.msra.mxu0 0.0
    %71 = vmatprep.subr.mxu0 0.0
    %72 = vmatpush1.msra.mxu0 0.0
    %73 = vmatprep.subr.mxu0 0.0
    %74 = vmatpush1.msra.mxu0 0.0
    %75 = vmatprep.subr.mxu0 0.0
    %76 = vmatpush1.msra.mxu0 0.0
    %77 = vmatprep.subr.mxu0 0.0
    %78 = vmatpush1.msra.mxu0 0.0
    %79 = vmatprep.subr.mxu0 0.0
    %80 = vmatpush1.msra.mxu0 0.0
    %81 = vmatprep.subr.mxu0 0.0
    %82 = vmatpush1.msra.mxu0 0.0
    %83 = vmatprep.subr.mxu0 0.0
    %84 = vmatpush1.msra.mxu0 0.0
    %85 = vmatprep.subr.mxu0 0.0
    %86 = vmatpush1.msra.mxu0 0.0
    %87 = vmatprep.subr.mxu0 0.0
    %88 = vmatpush1.msra.mxu0 0.0
    %89 = vmatprep.subr.mxu0 0.0
    %90 = vmatpush1.msra.mxu0 0.0
    %91 = vmatprep.subr.mxu0 0.0
    %92 = vmatpush1.msra.mxu0 0.0
    %93 = vmatprep.subr.mxu0 0.0
    %94 = vmatpush1.msra.mxu0 0.0
    %95 = vmatprep.subr.mxu0 0.0
    %96 = vmatpush1.msra.mxu0 0.0
    %97 = vmatprep.subr.mxu0 0.0
    %98 = vmatpush1.msra.mxu0 0.0
    %99 = vmatprep.subr.mxu0 0.0
    %100 = vmatpush1.msra.mxu0 0.0
    %101 = vmatprep.subr.mxu0 0.0
    %102 = vmatpush1.msra.mxu0 0.0
    %103 = vmatprep.subr.mxu0 0.0
    %104 = vmatpush1.msra.mxu0 0.0
    %105 = vmatprep.mubr.f32.mxu0 0.0
    %106 = vmatmul.mubr.f32.gmra.mrb[0].mxu0 %v36
    %v107 = vpop.f32.mrb[0].mxu0
    %v108 = vadd.f32 %v32, %v107
    %v109 = vpop.f32.mrb[0].mxu0
    %110 = vmatprep.mubr.f32.mxu0 0.0
    %111 = vmatmul.mubr.f32.gmra.mrb[0].mxu0 %v39
    %v112 = vpop.f32.mrb[0].mxu0
    %v113 = vadd.f32 %v32, %v112
    %v114 = vpop.f32.mrb[0].mxu0
    %115 = vdwg.mxu0
    %v116 = vmul.f32 %v108, 0.5
    %v117 = vmul.f32 %v113, 0.5
    %v118 = vmul.f32 %v108, %v108
    %v119 = vmul.f32 %v113, %v113
    %v120 = vmul.f32 %v108, %v118
    %v121 = vmul.f32 %v113, %v119
    %v122 = vmul.f32 %v120, 0.044715
    %v123 = vmul.f32 %v121, 0.044715
    %v124 = vadd.f32 %v108, %v122
    %v125 = vadd.f32 %v113, %v123
    %v126 = vmul.f32 %v124, 0.7978846
    %v127 = vmul.f32 %v125, 0.7978846
    %v128 = vtanh.pop %v126
    %v129 = vtanh.pop %v127
    %v130 = vadd.f32 %v128, 1.0
    %v131 = vadd.f32 %v129, 1.0
    %v132 = vmul.f32 %v116, %v130
    %v133 = vmul.f32 %v117, %v131
    %v134 = vld [vmem:[%s3] sm:$0xff]
    %v135 = vld [vmem:[%s3 + $0x8] sm:$0xff]
    %v136 = vld [vmem:[%s3 + $0x10] sm:$0xff]
    %v137 = vld [vmem:[%s3 + $0x18] sm:$0xff]
    %v138 = vld [vmem:[%s3 + $0x20] sm:$0xff]
    %v139 = vld [vmem:[%s3 + $0x28] sm:$0xff]
    %v140 = vld [vmem:[%s3 + $0x30] sm:$0xff]
    %v141 = vld [vmem:[%s3 + $0x38] sm:$0xff]
    %v142 = vld [vmem:[%s3 + $0x40] sm:$0xff]
    %v143 = vld [vmem:[%s3 + $0x48] sm:$0xff]
    %v144 = vld [vmem:[%s3 + $0x50] sm:$0xff]
    %v145 = vld [vmem:[%s3 + $0x58] sm:$0xff]
    %v146 = vld [vmem:[%s3 + $0x60] sm:$0xff]
    %v147 = vld [vmem:[%s3 + $0x68] sm:$0xff]
    %v148 = vld [vmem:[%s3 + $0x70] sm:$0xff]
    %v149 = vld [vmem:[%s3 + $0x78] sm:$0xff]
    %150 = vmatprep.subr.mxu0 0.0
    %151 = vmatpush1.msra.mxu0 %v134
    %152 = vmatprep.subr.mxu0 0.0
    %153 = vmatpush1.msra.mxu0 %v135
    %154 = vmatprep.subr.mxu0 0.0
    %155 = vmatpush1.msra.mxu0 %v136
    %156 = vmatprep.subr.mxu0 0.0
    %157 = vmatpush1.msra.mxu0 %v137
    %158 = vmatprep.subr.mxu0 0.0
    %159 = vmatpush1.msra.mxu0 %v138
    %160 = vmatprep.subr.mxu0 0.0
    %161 = vmatpush1.msra.mxu0 %v139
    %162 = vmatprep.subr.mxu0 0.0
    %163 = vmatpush1.msra.mxu0 %v140
    %164 = vmatprep.subr.mxu0 0.0
    %165 = vmatpush1.msra.mxu0 %v141
    %166 = vmatprep.subr.mxu0 0.0
    %167 = vmatpush1.msra.mxu0 %v142
    %168 = vmatprep.subr.mxu0 0.0
    %169 = vmatpush1.msra.mxu0 %v143
    %170 = vmatprep.subr.mxu0 0.0
    %171 = vmatpush1.msra.mxu0 %v144
    %172 = vmatprep.subr.mxu0 0.0
    %173 = vmatpush1.msra.mxu0 %v145
    %174 = vmatprep.subr.mxu0 0.0
    %175 = vmatpush1.msra.mxu0 %v146
    %176 = vmatprep.subr.mxu0 0.0
    %177 = vmatpush1.msra.mxu0 %v147
    %178 = vmatprep.subr.mxu0 0.0
    %179 = vmatpush1.msra.mxu0 %v148
    %180 = vmatprep.subr.mxu0 0.0
    %181 = vmatpush1.msra.mxu0 %v149
    %182 = vmatprep.subr.mxu0 0.0
    %183 = vmatpush1.msra.mxu0 0.0
    %184 = vmatprep.subr.mxu0 0.0
    %185 = vmatpush1.msra.mxu0 0.0
    %186 = vmatprep.subr.mxu0 0.0
    %187 = vmatpush1.msra.mxu0 0.0
    %188 = vmatprep.subr.mxu0 0.0
    %189 = vmatpush1.msra.mxu0 0.0
    %190 = vmatprep.subr.mxu0 0.0
    %191 = vmatpush1.msra.mxu0 0.0
    %192 = vmatprep.subr.mxu0 0.0
    %193 = vmatpush1.msra.mxu0 0.0
    %194 = vmatprep.subr.mxu0 0.0
    %195 = vmatpush1.msra.mxu0 0.0
    %196 = vmatprep.subr.mxu0 0.0
    %197 = vmatpush1.msra.mxu0 0.0
    %198 = vmatprep.subr.mxu0 0.0
    %199 = vmatpush1.msra.mxu0 0.0
    %200 = vmatprep.subr.mxu0 0.0
    %201 = vmatpush1.msra.mxu0 0.0
    %202 = vmatprep.subr.mxu0 0.0
    %203 = vmatpush1.msra.mxu0 0.0
    %204 = vmatprep.subr.mxu0 0.0
    %205 = vmatpush1.msra.mxu0 0.0
    %206 = vmatprep.subr.mxu0 0.0
    %207 = vmatpush1.msra.mxu0 0.0
    %208 = vmatprep.subr.mxu0 0.0
    %209 = vmatpush1.msra.mxu0 0.0
    %210 = vmatprep.subr.mxu0 0.0
    %211 = vmatpush1.msra.mxu0 0.0
    %212 = vmatprep.subr.mxu0 0.0
    %213 = vmatpush1.msra.mxu0 0.0
    %214 = vmatprep.mubr.f32.mxu0 0.0
    %215 = vmatmul.mubr.f32.gmra.mrb[0].mxu0 %v132
    %v216 = vpop.f32.mrb[0].mxu0
    %v217 = vadd.f32 0.0, %v216
    %v218 = vpop.f32.mrb[0].mxu0
    %219 = vmatprep.mubr.f32.mxu0 0.0
    %220 = vmatmul.mubr.f32.gmra.mrb[0].mxu0 %v133
    %v221 = vpop.f32.mrb[0].mxu0
    %v222 = vadd.f32 0.0, %v221
    %v223 = vpop.f32.mrb[0].mxu0
    %224 = vdwg.mxu0
    %225 = vst.msk [vmem:[#allocation2] sm:$0xff] %vm34, %v217
    %226 = vst.msk [vmem:[#allocation2 + $0x8] sm:$0xff] %vm34, %v222
    %v227 = vld [vmem:[#allocation2] sm:$0xff]
    %v228 = vld [vmem:[#allocation2 + $0x8] sm:$0xff]
    %v229 = vld [vmem:[%s4] sm:$0x1]
    %v231 = vlaneseq
    %v232 = vshrl.u32 %v231, 7
    %v233 = vsub.s32 0, %v232
    %v234 = vrot.slane %v229, %v233
    %v236 = vadd.f32 %v227, %v234
    %v237 = vadd.f32 %v228, %v234
    %238 = vst.msk [vmem:[#allocation3] sm:$0xff] %vm34, %v236
    %239 = vst.msk [vmem:[#allocation3 + $0x8] sm:$0xff] %vm34, %v237
    // Predicated region
    $region22: #{tpu_custom_call.1} parent=1 // pred_check
      _
    $region23: #{tpu_custom_call.1} parent=1 // pred_check_branch
      %241 = sbr.rel (0) target = $region25
    $region24: #{tpu_custom_call.1} parent=1 // pred_region
      %s243 = ssub.s32 256, 256
      %244 = vsyncadd [#allocation4], %s243
      %s245 = sshll.u32 [#allocation3], 4
      %s246 = int_to_ptr.vmem [resolvable:$true] %s245
      %251 = dma.vmem_to_hbm [thread:$0]  %s246, 256, %s5, [#allocation4], 128, 128, 8
    $region25: #{tpu_custom_call.1} parent=1 // pred_fallthru
      _
    // Predicated region
    $region26: #{tpu_custom_call.1} parent=1 // pred_check
      _
    $region27: #{tpu_custom_call.1} parent=1 // pred_check_branch
      %253 = sbr.rel (0) target = $region29
    $region28: #{tpu_custom_call.1} parent=1 // pred_region
      %254 = dma.done [#allocation4], 256
    $region29: #{tpu_custom_call.1} parent=1 // pred_fallthru
      _
    %255 = vsyncpa [#allocation4], 1

</llo_original>
